<compile_context>
chip_gen: v7x
topology: tpu7x:2x2x1
jax: 0.10.0
libtpu: 0.0.40
codegen_flags: <defaults>
</compile_context>

<pallas_src>
import jax
import jax.numpy as jnp
from jax.experimental import pallas as pl
from jax.experimental.pallas import tpu as pltpu

F_IN = 17               # HalfCheetah state dim
ACT_DIM = 6             # action dim
OUT_DIM = 2 * ACT_DIM   # mean + log_std
LANES = 128             # lane width
MAX_TB = 256            # max batch tile (good MXU fill on v5e/v6e/v7x)


def _actor_kernel(x_ref, w1_ref, b1_ref, w2_ref, b2_ref, w3_ref, b3_ref, out_ref):
    cdt = w1_ref.dtype  # compute dtype fed to the MXU (bfloat16)

    # Layer 1: Linear(17 -> H) + ReLU  (bf16 operands, f32 accumulation)
    x = x_ref[...].astype(cdt)
    h = jnp.dot(x, w1_ref[...], preferred_element_type=jnp.float32) + b1_ref[...]
    h = jnp.maximum(h, 0.0)

    # Layer 2: Linear(H -> H) + ReLU
    h = jnp.dot(h.astype(cdt), w2_ref[...], preferred_element_type=jnp.float32) + b2_ref[...]
    h = jnp.maximum(h, 0.0)

    # Layer 3: Linear(H -> 12); fused mean|std output tile.
    out = jnp.dot(h.astype(cdt), w3_ref[...], preferred_element_type=jnp.float32) + b3_ref[...]
    std = jnp.exp(jnp.clip(out, -20.0, 3.0))      # exp on EUP, clip on VPU
    lane = jax.lax.broadcasted_iota(jnp.int32, out.shape, 1)
    # lanes [0:ACT_DIM) -> raw mean, lanes [ACT_DIM:) -> exp(clamped log_std)
    out_ref[...] = jnp.where(lane < ACT_DIM, out, std)


def prepare_params(params, compute_dtype=jnp.bfloat16):
    """One-time padding + dtype cast of the params (call once, reuse per forward).
    `params` = (w1, b1, w2, b2, w3, b3) with weights stored as (in, out) = W.T."""
    w1, b1, w2, b2, w3, b3 = params
    hidden = w1.shape[1]
    H_pad = pl.cdiv(hidden, LANES) * LANES
    f32 = jnp.float32

    w1_p = jnp.zeros((F_IN, H_pad), compute_dtype).at[:, :hidden].set(w1.astype(compute_dtype))
    b1_p = jnp.zeros((1, H_pad), f32).at[0, :hidden].set(b1.astype(f32))
    w2_p = jnp.zeros((H_pad, H_pad), compute_dtype).at[:hidden, :hidden].set(w2.astype(compute_dtype))
    b2_p = jnp.zeros((1, H_pad), f32).at[0, :hidden].set(b2.astype(f32))
    w3_p = jnp.zeros((H_pad, LANES), compute_dtype).at[:hidden, :OUT_DIM].set(w3.astype(compute_dtype))
    b3_p = jnp.zeros((1, LANES), f32).at[0, :OUT_DIM].set(b3.astype(f32))
    return (w1_p, b1_p, w2_p, b2_p, w3_p, b3_p)


def _pick_tile(batch):
    """Pick (tb, B_pad): smallest multiple-of-8 tile that covers `batch` in
    cdiv(batch, MAX_TB) grid steps -> minimal zero-padding, tb <= MAX_TB."""
    n_tiles = max(1, pl.cdiv(batch, MAX_TB))
    tb = pl.cdiv(pl.cdiv(batch, n_tiles), 8) * 8
    tb = min(tb, MAX_TB)
    return tb, pl.cdiv(batch, tb) * tb


def half_cheetah_actor(state, prepared_params, *, tb=None):
    """Forward pass. state: (B, 17). Returns (mean (B, 6), std (B, 6)), float32."""
    w1_p, b1_p, w2_p, b2_p, w3_p, b3_p = prepared_params
    H_pad = w1_p.shape[1]
    B = state.shape[0]

    if tb is None:
        tb, B_pad = _pick_tile(B)
    else:
        B_pad = pl.cdiv(B, tb) * tb

    x = state.astype(jnp.float32)
    if B_pad != B:
        x = jnp.zeros((B_pad, F_IN), jnp.float32).at[:B].set(x)

    bcast = lambda i: (0, 0)
    grid = (B_pad // tb,)

    fused = pl.pallas_call(
        _actor_kernel,
        out_shape=jax.ShapeDtypeStruct((B_pad, LANES), jnp.float32),
        grid_spec=pltpu.PrefetchScalarGridSpec(
            num_scalar_prefetch=0,
            grid=grid,
            in_specs=[
                pl.BlockSpec((tb, F_IN), lambda i: (i, 0)),   # state tile (true K=17)
                pl.BlockSpec((F_IN, H_pad), bcast),           # W1^T (bf16, resident)
                pl.BlockSpec((1, H_pad), bcast),              # b1 (f32)
                pl.BlockSpec((H_pad, H_pad), bcast),          # W2^T
                pl.BlockSpec((1, H_pad), bcast),              # b2
                pl.BlockSpec((H_pad, LANES), bcast),          # W3^T
                pl.BlockSpec((1, LANES), bcast),              # b3
            ],
            out_specs=pl.BlockSpec((tb, LANES), lambda i: (i, 0)),  # fused mean|std
        ),
        compiler_params=pltpu.CompilerParams(
            dimension_semantics=("parallel",),
            vmem_limit_bytes=64 << 20,
        ),
        # TODO(synk): for very large hidden dims on v7x (64 MiB VMEM), cap weight
        # double-buffering (pipeline_mode=pl.Buffered(1) on the constant-index
        # weight specs) or tile the hidden axis.
    )(x, w1_p, b1_p, w2_p, b2_p, w3_p, b3_p)

    mean = fused[:B, :ACT_DIM]
    std = fused[:B, ACT_DIM:OUT_DIM]
    return mean, std


def init_params(key, hidden_dim):
    """Deterministic init mimicking PyTorch nn.Linear default (uniform +-1/sqrt(fan_in)).
    Weights are stored as (in, out) = W.T so the kernel computes x @ W.T + b."""
    ks = jax.random.split(key, 6)

    def lin(kw, kb, fan_in, fan_out):
        bound = 1.0 / jnp.sqrt(float(fan_in))
        w = jax.random.uniform(kw, (fan_in, fan_out), jnp.float32, -bound, bound)
        b = jax.random.uniform(kb, (fan_out,), jnp.float32, -bound, bound)
        return w, b

    w1, b1 = lin(ks[0], ks[1], F_IN, hidden_dim)
    w2, b2 = lin(ks[2], ks[3], hidden_dim, hidden_dim)
    w3, b3 = lin(ks[4], ks[5], hidden_dim, OUT_DIM)
    return (w1, b1, w2, b2, w3, b3)


def _reference(state, params, compute_dtype=jnp.float32):
    """Pure-JAX forward matching the PyTorch module. With compute_dtype=bfloat16 it
    mirrors the kernel's MXU numerics (bf16 operands, f32 accumulation)."""
    w1, b1, w2, b2, w3, b3 = params
    mm = lambda a, w: jnp.dot(a.astype(compute_dtype), w.astype(compute_dtype),
                              preferred_element_type=jnp.float32)
    h = jnp.maximum(mm(state, w1) + b1, 0.0)
    h = jnp.maximum(mm(h, w2) + b2, 0.0)
    out = mm(h, w3) + b3
    mean, log_std = out[:, :ACT_DIM], out[:, ACT_DIM:]
    return mean, jnp.exp(jnp.clip(log_std, -20.0, 3.0))


def _check(state, params, mean, std):
    B = state.shape[0]
    assert mean.shape == (B, ACT_DIM) and std.shape == (B, ACT_DIM)
    # Numerics-matched reference (bf16 operands, f32 accumulation) -> tight check.
    m_bf, s_bf = _reference(state, params, jnp.bfloat16)
    assert jnp.allclose(mean, m_bf, atol=5e-3, rtol=5e-3), float(jnp.max(jnp.abs(mean - m_bf)))
    assert jnp.allclose(std, s_bf, atol=5e-3, rtol=5e-3), float(jnp.max(jnp.abs(std - s_bf)))
    # Full-f32 reference -> loose semantic check (bf16 matmul error budget).
    m_f32, s_f32 = _reference(state, params, jnp.float32)
    assert jnp.allclose(mean, m_f32, atol=1e-1, rtol=1e-1)
    assert jnp.allclose(std, s_f32, atol=1e-1, rtol=1e-1)


if __name__ == "__main__":
    key = jax.random.PRNGKey(0)
    k_s1, k_p1, k_s2, k_p2 = jax.random.split(key, 4)

    # Case 1: small batch / hidden (single grid step, no padding).
    batch, hidden_dim = 8, 32
    state = jax.random.normal(k_s1, (batch, F_IN), jnp.float32)
    params = init_params(k_p1, hidden_dim)
    prepped = prepare_params(params)
    mean, std = half_cheetah_actor(state, prepped)
    jax.block_until_ready((mean, std))
    _check(state, params, mean, std)

    # Case 2: batch not a multiple of 8 (padding path) + hidden=64.
    batch2, hidden_dim2 = 37, 64
    state2 = jax.random.normal(k_s2, (batch2, F_IN), jnp.float32)
    params2 = init_params(k_p2, hidden_dim2)
    prepped2 = prepare_params(params2)
    mean2, std2 = half_cheetah_actor(state2, prepped2)
    jax.block_until_ready((mean2, std2))
    _check(state2, params2, mean2, std2)

    print("KERNEL_OK")
</pallas_src>

<mosaic_0001>
module attributes {stable_mosaic.version = 11 : i64} {
  func.func @_actor_kernel(%arg0: i32, %arg1: memref<8x17xf32, #tpu.memory_space<vmem>>, %arg2: memref<17x128xbf16, #tpu.memory_space<vmem>>, %arg3: memref<1x128xf32, #tpu.memory_space<vmem>>, %arg4: memref<128x128xbf16, #tpu.memory_space<vmem>>, %arg5: memref<1x128xf32, #tpu.memory_space<vmem>>, %arg6: memref<128x128xbf16, #tpu.memory_space<vmem>>, %arg7: memref<1x128xf32, #tpu.memory_space<vmem>>, %arg8: memref<8x128xf32, #tpu.memory_space<vmem>>) attributes {dimension_semantics = [#tpu.dimension_semantics<parallel>], iteration_bounds = array<i64: 1>, scalar_prefetch = 0 : i64, scratch_operands = 0 : i64, tpu.core_type = #tpu.core_type<tc>, window_params = [{transform_indices = @transform_0, window_bounds = array<i64: 8, 17>}, {pipeline_mode = #tpu.pipeline_mode<synchronous>, transform_indices = @transform_1, window_bounds = array<i64: 17, 128>}, {pipeline_mode = #tpu.pipeline_mode<synchronous>, transform_indices = @transform_2, window_bounds = array<i64: 1, 128>}, {pipeline_mode = #tpu.pipeline_mode<synchronous>, transform_indices = @transform_3, window_bounds = array<i64: 128, 128>}, {pipeline_mode = #tpu.pipeline_mode<synchronous>, transform_indices = @transform_4, window_bounds = array<i64: 1, 128>}, {pipeline_mode = #tpu.pipeline_mode<synchronous>, transform_indices = @transform_5, window_bounds = array<i64: 128, 128>}, {pipeline_mode = #tpu.pipeline_mode<synchronous>, transform_indices = @transform_6, window_bounds = array<i64: 1, 128>}, {transform_indices = @transform_7, window_bounds = array<i64: 8, 128>}]} {
    %c0 = arith.constant 0 : index
    %c0_0 = arith.constant 0 : index
    %0 = vector.load %arg1[%c0, %c0_0] : memref<8x17xf32, #tpu.memory_space<vmem>>, vector<8x17xf32>
    %1 = arith.truncf %0 : vector<8x17xf32> to vector<8x17xbf16>
    %c0_1 = arith.constant 0 : index
    %c0_2 = arith.constant 0 : index
    %2 = vector.load %arg2[%c0_1, %c0_2] : memref<17x128xbf16, #tpu.memory_space<vmem>>, vector<17x128xbf16>
    %cst = arith.constant dense<0.000000e+00> : vector<8x128xf32>
    %3 = tpu.matmul %1, %2, %cst {dimension_numbers = #tpu.dot_dimension_numbers<[1], [0], [0], [1], [0, 0, 1, 1], [], []>} : vector<8x17xbf16>, vector<17x128xbf16>, vector<8x128xf32> -> vector<8x128xf32>
    %c0_3 = arith.constant 0 : index
    %c0_4 = arith.constant 0 : index
    %4 = vector.load %arg3[%c0_3, %c0_4] : memref<1x128xf32, #tpu.memory_space<vmem>>, vector<1x128xf32>
    %5 = vector.broadcast %4 : vector<1x128xf32> to vector<8x128xf32>
    %6 = arith.addf %3, %5 : vector<8x128xf32>
    %cst_5 = arith.constant 0.000000e+00 : f32
    %7 = vector.broadcast %cst_5 : f32 to vector<8x128xf32>
    %8 = arith.maximumf %6, %7 : vector<8x128xf32>
    %9 = arith.truncf %8 : vector<8x128xf32> to vector<8x128xbf16>
    %c0_6 = arith.constant 0 : index
    %c0_7 = arith.constant 0 : index
    %10 = vector.load %arg4[%c0_6, %c0_7] : memref<128x128xbf16, #tpu.memory_space<vmem>>, vector<128x128xbf16>
    %cst_8 = arith.constant dense<0.000000e+00> : vector<8x128xf32>
    %11 = tpu.matmul %9, %10, %cst_8 {dimension_numbers = #tpu.dot_dimension_numbers<[1], [0], [0], [1], [0, 0, 1, 1], [], []>} : vector<8x128xbf16>, vector<128x128xbf16>, vector<8x128xf32> -> vector<8x128xf32>
    %c0_9 = arith.constant 0 : index
    %c0_10 = arith.constant 0 : index
    %12 = vector.load %arg5[%c0_9, %c0_10] : memref<1x128xf32, #tpu.memory_space<vmem>>, vector<1x128xf32>
    %13 = vector.broadcast %12 : vector<1x128xf32> to vector<8x128xf32>
    %14 = arith.addf %11, %13 : vector<8x128xf32>
    %cst_11 = arith.constant 0.000000e+00 : f32
    %15 = vector.broadcast %cst_11 : f32 to vector<8x128xf32>
    %16 = arith.maximumf %14, %15 : vector<8x128xf32>
    %17 = arith.truncf %16 : vector<8x128xf32> to vector<8x128xbf16>
    %c0_12 = arith.constant 0 : index
    %c0_13 = arith.constant 0 : index
    %18 = vector.load %arg6[%c0_12, %c0_13] : memref<128x128xbf16, #tpu.memory_space<vmem>>, vector<128x128xbf16>
    %cst_14 = arith.constant dense<0.000000e+00> : vector<8x128xf32>
    %19 = tpu.matmul %17, %18, %cst_14 {dimension_numbers = #tpu.dot_dimension_numbers<[1], [0], [0], [1], [0, 0, 1, 1], [], []>} : vector<8x128xbf16>, vector<128x128xbf16>, vector<8x128xf32> -> vector<8x128xf32>
    %c0_15 = arith.constant 0 : index
    %c0_16 = arith.constant 0 : index
    %20 = vector.load %arg7[%c0_15, %c0_16] : memref<1x128xf32, #tpu.memory_space<vmem>>, vector<1x128xf32>
    %21 = vector.broadcast %20 : vector<1x128xf32> to vector<8x128xf32>
    %22 = arith.addf %19, %21 : vector<8x128xf32>
    %cst_17 = arith.constant -2.000000e+01 : f32
    %cst_18 = arith.constant 3.000000e+00 : f32
    %23 = vector.broadcast %cst_17 : f32 to vector<8x128xf32>
    %24 = arith.maximumf %23, %22 : vector<8x128xf32>
    %25 = vector.broadcast %cst_18 : f32 to vector<8x128xf32>
    %26 = arith.minimumf %25, %24 : vector<8x128xf32>
    %27 = math.exp %26 : vector<8x128xf32>
    %28 = tpu.iota {dimensions = array<i32: 1>} : vector<8x128xi32>
    %c6_i32 = arith.constant 6 : i32
    %29 = vector.broadcast %c6_i32 : i32 to vector<8x128xi32>
    %30 = arith.cmpi slt, %28, %29 : vector<8x128xi32>
    %31 = arith.select %30, %22, %27 : vector<8x128xi1>, vector<8x128xf32>
    %c0_19 = arith.constant 0 : index
    %c0_20 = arith.constant 0 : index
    %32 = vector.load %arg8[%c0_19, %c0_20] : memref<8x128xf32, #tpu.memory_space<vmem>>, vector<8x128xf32>
    tpu.vector_store %arg8[%c0_19, %c0_20], %31 {strides = array<i32>} : memref<8x128xf32, #tpu.memory_space<vmem>>, vector<8x128xf32>,
    return
  }
  func.func @transform_0(%arg0: i32) -> (i32, i32) {
    %c0_i32 = arith.constant 0 : i32
    %c0_i32_0 = arith.constant 0 : i32
    return %arg0, %c0_i32 : i32, i32
  }
  func.func @transform_1(%arg0: i32) -> (i32, i32) {
    %c0_i32 = arith.constant 0 : i32
    %c0_i32_0 = arith.constant 0 : i32
    %c0_i32_1 = arith.constant 0 : i32
    return %c0_i32, %c0_i32_0 : i32, i32
  }
  func.func @transform_2(%arg0: i32) -> (i32, i32) {
    %c0_i32 = arith.constant 0 : i32
    %c0_i32_0 = arith.constant 0 : i32
    %c0_i32_1 = arith.constant 0 : i32
    return %c0_i32, %c0_i32_0 : i32, i32
  }
  func.func @transform_3(%arg0: i32) -> (i32, i32) {
    %c0_i32 = arith.constant 0 : i32
    %c0_i32_0 = arith.constant 0 : i32
    %c0_i32_1 = arith.constant 0 : i32
    return %c0_i32, %c0_i32_0 : i32, i32
  }
  func.func @transform_4(%arg0: i32) -> (i32, i32) {
    %c0_i32 = arith.constant 0 : i32
    %c0_i32_0 = arith.constant 0 : i32
    %c0_i32_1 = arith.constant 0 : i32
    return %c0_i32, %c0_i32_0 : i32, i32
  }
  func.func @transform_5(%arg0: i32) -> (i32, i32) {
    %c0_i32 = arith.constant 0 : i32
    %c0_i32_0 = arith.constant 0 : i32
    %c0_i32_1 = arith.constant 0 : i32
    return %c0_i32, %c0_i32_0 : i32, i32
  }
  func.func @transform_6(%arg0: i32) -> (i32, i32) {
    %c0_i32 = arith.constant 0 : i32
    %c0_i32_0 = arith.constant 0 : i32
    %c0_i32_1 = arith.constant 0 : i32
    return %c0_i32, %c0_i32_0 : i32, i32
  }
  func.func @transform_7(%arg0: i32) -> (i32, i32) {
    %c0_i32 = arith.constant 0 : i32
    %c0_i32_0 = arith.constant 0 : i32
    return %arg0, %c0_i32 : i32, i32
  }
}

</mosaic_0001>

<llo_original>
// kernel: tpu_custom_call.1
$region0: #{tpu_custom_call.1}
  #allocation0 [shape = 'u32[]', space=smem, size = 0x4, offset = 0x4, fixed_abs, tag = 'smem constant byte address 0x4 - core index']
  #allocation1 [shape = 'u32[144,128]{1,0:T(1,128)}', space=vmem, size = 0x12000, scoped, tag = 'internal scratch']
  %s0 = inlined_call_operand.hbm [shape: f32[8,17], index: 0, kind: input, shape index: {}]
  %s1 = inlined_call_operand.hbm [shape: bf16[17,128], index: 1, kind: input, shape index: {}]
  %s2 = inlined_call_operand.hbm [shape: f32[1,128], index: 2, kind: input, shape index: {}]
  %s3 = inlined_call_operand.hbm [shape: bf16[128,128], index: 3, kind: input, shape index: {}]
  %s4 = inlined_call_operand.hbm [shape: f32[1,128], index: 4, kind: input, shape index: {}]
  %s5 = inlined_call_operand.hbm [shape: bf16[128,128], index: 5, kind: input, shape index: {}]
  %s6 = inlined_call_operand.hbm [shape: f32[1,128], index: 6, kind: input, shape index: {}]
  %s7 = inlined_call_operand.hbm [shape: f32[8,128], index: 7, kind: output, shape index: {}]
  %s8 = sld [smem:[#allocation0]]
  $region66: #{tpu_custom_call.1} parent=0
    _
  %s10 = ssub.s32 1, %s8
  %s11 = scalar_select 0, %s10, %s8
  $region1: #{tpu_custom_call.1} parent=0
    #allocation2 [shape = 'u8[4096]{0}', space=vmem, size = 0x1000, scoped, tag = 'input window, operand 0, single buffered']
    #allocation3 [shape = 's32[1]{0}', space=sflag, size = 0x4, scoped, tag = 'scoped memory for tpu_custom_call.1']
    #allocation4 [shape = 's32[1]{0}', space=sflag, size = 0x4, scoped, tag = 'scoped memory for tpu_custom_call.1']
    #allocation5 [shape = 'u8[6144]{0}', space=vmem, size = 0x1800, scoped, tag = 'input window, operand 1, single buffered']
    #allocation6 [shape = 's32[1]{0}', space=sflag, size = 0x4, scoped, tag = 'scoped memory for tpu_custom_call.1']
    #allocation7 [shape = 'u8[512]{0}', space=vmem, size = 0x400, scoped, tag = 'input window, operand 2, single buffered']
    #allocation8 [shape = 'u8[32768]{0}', space=vmem, size = 0x8000, scoped, tag = 'input window, operand 3, single buffered']
    #allocation9 [shape = 's32[1]{0}', space=sflag, size = 0x4, scoped, tag = 'scoped memory for tpu_custom_call.1']
    #allocation10 [shape = 'u8[512]{0}', space=vmem, size = 0x400, scoped, tag = 'input window, operand 4, single buffered']
    #allocation11 [shape = 'u8[32768]{0}', space=vmem, size = 0x8000, scoped, tag = 'input window, operand 5, single buffered']
    #allocation12 [shape = 's32[1]{0}', space=sflag, size = 0x4, scoped, tag = 'scoped memory for tpu_custom_call.1']
    #allocation13 [shape = 'u8[512]{0}', space=vmem, size = 0x400, scoped, tag = 'input window, operand 6, single buffered']
    #allocation14 [shape = 'u8[4096]{0}', space=vmem, size = 0x1000, scoped, tag = 'output window, operand 0, single buffered']
    %12 = vsyncpa [#allocation3], 0
    %13 = vsyncpa [#allocation6], 0
    %14 = vsyncpa [#allocation9], 0
    %15 = vsyncpa [#allocation12], 0
    %16 = vsyncpa [#allocation4], 0
    // Predicated region
    $region2: #{tpu_custom_call.1} parent=1 // pred_check
      _
    $region3: #{tpu_custom_call.1} parent=1 // pred_check_branch
      %18 = sbr.rel (0) target = $region5
    $region4: #{tpu_custom_call.1} parent=1 // pred_region
      %s20 = ssub.s32 128, 128
      %21 = vsyncadd [#allocation3], %s20
      %s23 = sshll.u32 [#allocation2], 4
      %s24 = int_to_ptr.vmem [resolvable:$true] %s23
      %26 = dma.hbm_to_vmem [thread:$0]  %s0, 128, %s24, [#allocation3]
    $region5: #{tpu_custom_call.1} parent=1 // pred_fallthru
      _
    // Predicated region
    $region6: #{tpu_custom_call.1} parent=1 // pred_check
      _
    $region7: #{tpu_custom_call.1} parent=1 // pred_check_branch
      %28 = sbr.rel (0) target = $region9
    $region8: #{tpu_custom_call.1} parent=1 // pred_region
      %s30 = ssub.s32 192, 192
      %31 = vsyncadd [#allocation6], %s30
      %s32 = sshll.u32 [#allocation5], 4
      %s33 = int_to_ptr.vmem [resolvable:$true] %s32
      %38 = dma.hbm_to_vmem [thread:$0]  %s1, 192, %s33, [#allocation6], 64, 64, 4
    $region9: #{tpu_custom_call.1} parent=1 // pred_fallthru
      _
    // Predicated region
    $region10: #{tpu_custom_call.1} parent=1 // pred_check
      _
    $region11: #{tpu_custom_call.1} parent=1 // pred_check_branch
      %40 = sbr.rel (0) target = $region13
    $region12: #{tpu_custom_call.1} parent=1 // pred_region
      %s42 = ssub.s32 16, 16
      %43 = vsyncadd [#allocation6], %s42
      %s45 = sshll.u32 [#allocation7], 4
      %s46 = int_to_ptr.vmem [resolvable:$true] %s45
      %48 = dma.hbm_to_vmem [thread:$0]  %s2, 16, %s46, [#allocation6]
    $region13: #{tpu_custom_call.1} parent=1 // pred_fallthru
      _
    // Predicated region
    $region14: #{tpu_custom_call.1} parent=1 // pred_check
      _
    $region15: #{tpu_custom_call.1} parent=1 // pred_check_branch
      %50 = sbr.rel (0) target = $region17
    $region16: #{tpu_custom_call.1} parent=1 // pred_region
      %s52 = ssub.s32 1024, 1024
      %53 = vsyncadd [#allocation9], %s52
      %s54 = sshll.u32 [#allocation8], 4
      %s55 = int_to_ptr.vmem [resolvable:$true] %s54
      %60 = dma.hbm_to_vmem [thread:$0]  %s3, 1024, %s55, [#allocation9], 64, 64, 4
    $region17: #{tpu_custom_call.1} parent=1 // pred_fallthru
      _
    // Predicated region
    $region18: #{tpu_custom_call.1} parent=1 // pred_check
      _
    $region19: #{tpu_custom_call.1} parent=1 // pred_check_branch
      %62 = sbr.rel (0) target = $region21
    $region20: #{tpu_custom_call.1} parent=1 // pred_region
      %s64 = ssub.s32 16, 16
      %65 = vsyncadd [#allocation9], %s64
      %s67 = sshll.u32 [#allocation10], 4
      %s68 = int_to_ptr.vmem [resolvable:$true] %s67
      %70 = dma.hbm_to_vmem [thread:$0]  %s4, 16, %s68, [#allocation9]
    $region21: #{tpu_custom_call.1} parent=1 // pred_fallthru
      _
    // Predicated region
    $region22: #{tpu_custom_call.1} parent=1 // pred_check
      _
    $region23: #{tpu_custom_call.1} parent=1 // pred_check_branch
      %72 = sbr.rel (0) target = $region25
    $region24: #{tpu_custom_call.1} parent=1 // pred_region
      %s74 = ssub.s32 1024, 1024
      %75 = vsyncadd [#allocation12], %s74
      %s76 = sshll.u32 [#allocation11], 4
      %s77 = int_to_ptr.vmem [resolvable:$true] %s76
      %82 = dma.hbm_to_vmem [thread:$0]  %s5, 1024, %s77, [#allocation12], 64, 64, 4
    $region25: #{tpu_custom_call.1} parent=1 // pred_fallthru
      _
    // Predicated region
    $region26: #{tpu_custom_call.1} parent=1 // pred_check
      _
    $region27: #{tpu_custom_call.1} parent=1 // pred_check_branch
      %84 = sbr.rel (0) target = $region29
    $region28: #{tpu_custom_call.1} parent=1 // pred_region
      %s86 = ssub.s32 16, 16
      %87 = vsyncadd [#allocation12], %s86
      %s89 = sshll.u32 [#allocation13], 4
      %s90 = int_to_ptr.vmem [resolvable:$true] %s89
      %92 = dma.hbm_to_vmem [thread:$0]  %s6, 16, %s90, [#allocation12]
    $region29: #{tpu_custom_call.1} parent=1 // pred_fallthru
      _
    // Predicated region
    $region30: #{tpu_custom_call.1} parent=1 // pred_check
      _
    $region31: #{tpu_custom_call.1} parent=1 // pred_check_branch
      %94 = sbr.rel (0) target = $region33
    $region32: #{tpu_custom_call.1} parent=1 // pred_region
      %95 = dma.done [#allocation3], 128
    $region33: #{tpu_custom_call.1} parent=1 // pred_fallthru
      _
    // Predicated region
    $region34: #{tpu_custom_call.1} parent=1 // pred_check
      _
    $region35: #{tpu_custom_call.1} parent=1 // pred_check_branch
      %97 = sbr.rel (0) target = $region37
    $region36: #{tpu_custom_call.1} parent=1 // pred_region
      %98 = dma.done [#allocation6], 192
    $region37: #{tpu_custom_call.1} parent=1 // pred_fallthru
      _
    // Predicated region
    $region38: #{tpu_custom_call.1} parent=1 // pred_check
      _
    $region39: #{tpu_custom_call.1} parent=1 // pred_check_branch
      %100 = sbr.rel (0) target = $region41
    $region40: #{tpu_custom_call.1} parent=1 // pred_region
      %101 = dma.done [#allocation6], 16
    $region41: #{tpu_custom_call.1} parent=1 // pred_fallthru
      _
    // Predicated region
    $region42: #{tpu_custom_call.1} parent=1 // pred_check
      _
    $region43: #{tpu_custom_call.1} parent=1 // pred_check_branch
      %103 = sbr.rel (0) target = $region45
    $region44: #{tpu_custom_call.1} parent=1 // pred_region
      %104 = dma.done [#allocation9], 1024
    $region45: #{tpu_custom_call.1} parent=1 // pred_fallthru
      _
    // Predicated region
    $region46: #{tpu_custom_call.1} parent=1 // pred_check
      _
    $region47: #{tpu_custom_call.1} parent=1 // pred_check_branch
      %106 = sbr.rel (0) target = $region49
    $region48: #{tpu_custom_call.1} parent=1 // pred_region
      %107 = dma.done [#allocation9], 16
    $region49: #{tpu_custom_call.1} parent=1 // pred_fallthru
      _
    // Predicated region
    $region50: #{tpu_custom_call.1} parent=1 // pred_check
      _
    $region51: #{tpu_custom_call.1} parent=1 // pred_check_branch
      %109 = sbr.rel (0) target = $region53
    $region52: #{tpu_custom_call.1} parent=1 // pred_region
      %110 = dma.done [#allocation12], 1024
    $region53: #{tpu_custom_call.1} parent=1 // pred_fallthru
      _
    // Predicated region
    $region54: #{tpu_custom_call.1} parent=1 // pred_check
      _
    $region55: #{tpu_custom_call.1} parent=1 // pred_check_branch
      %112 = sbr.rel (0) target = $region57
    $region56: #{tpu_custom_call.1} parent=1 // pred_region
      %113 = dma.done [#allocation12], 16
    $region57: #{tpu_custom_call.1} parent=1 // pred_fallthru
      _
    %v115 = vld [vmem:[#allocation2] sm:$0xff]
    %v116 = vpack.c.bf16 %v115, %v115
    %v117 = vld [vmem:[#allocation5] sm:$0xf]
    %v118 = vld [vmem:[#allocation5 + $0x4] sm:$0xf]
    %v119 = vld [vmem:[#allocation5 + $0x8] sm:$0x1]
    %v120 = vld [vmem:[#allocation7] sm:$0x1]
    %v122 = vlaneseq
    %v123 = vshrl.u32 %v122, 7
    %v124 = vsub.s32 0, %v123
    %v125 = vrot.slane %v120, %v124
    %v130 = vunpack.c.l.b16 %v117
    %v131 = vunpack.c.l.b16 %v118
    %v132 = vunpack.c.l.b16 %v119
    %v133 = vpack.c.b16 %v131, %v130
    %v134 = vpack.c.b16 %v132, %v132
    %vm136 = vcmask 138240
    %v138 = vsel %vm136, %v116, 0
    %vm140 = vcmask 1040384
    %v141 = vsel 0, 4294967295, 65535
    %v142 = vsel %vm140, %v141, 0
    %v144 = vand.u32 %v134, %v142
    %146 = vmatprep.subr.bf16.mxu0 0
    %147 = vmatpush1.bf16.msra.mxu0 %v133
    %148 = vmatprep.subr.bf16.mxu0 0
    %149 = vmatpush1.bf16.msra.mxu0 %v144
    %150 = vmatprep.subr.bf16.mxu0 0
    %151 = vmatpush1.bf16.msra.mxu0 0
    %152 = vmatprep.subr.bf16.mxu0 0
    %153 = vmatpush1.bf16.msra.mxu0 0
    %154 = vmatprep.subr.bf16.mxu0 0
    %155 = vmatpush1.bf16.msra.mxu0 0
    %156 = vmatprep.subr.bf16.mxu0 0
    %157 = vmatpush1.bf16.msra.mxu0 0
    %158 = vmatprep.subr.bf16.mxu0 0
    %159 = vmatpush1.bf16.msra.mxu0 0
    %160 = vmatprep.subr.bf16.mxu0 0
    %161 = vmatpush1.bf16.msra.mxu0 0
    %162 = vmatprep.subr.bf16.mxu0 0
    %163 = vmatpush1.bf16.msra.mxu0 0
    %164 = vmatprep.subr.bf16.mxu0 0
    %165 = vmatpush1.bf16.msra.mxu0 0
    %166 = vmatprep.subr.bf16.mxu0 0
    %167 = vmatpush1.bf16.msra.mxu0 0
    %168 = vmatprep.subr.bf16.mxu0 0
    %169 = vmatpush1.bf16.msra.mxu0 0
    %170 = vmatprep.subr.bf16.mxu0 0
    %171 = vmatpush1.bf16.msra.mxu0 0
    %172 = vmatprep.subr.bf16.mxu0 0
    %173 = vmatpush1.bf16.msra.mxu0 0
    %174 = vmatprep.subr.bf16.mxu0 0
    %175 = vmatpush1.bf16.msra.mxu0 0
    %176 = vmatprep.subr.bf16.mxu0 0
    %177 = vmatpush1.bf16.msra.mxu0 0
    %178 = vmatprep.mubr.bf16.mxu0 0
    %179 = vmatmul.mubr.bf16.gmra.mrb[0].mxu0 %v138
    %v180 = vpop.f32.mrb[0].mxu0
    %v181 = vadd.f32 %v125, %v180
    %v182 = vpop.f32.mrb[0].mxu0
    %v183 = vpop.f32.mrb[0].mxu0
    %v184 = vpop.f32.mrb[0].mxu0
    %185 = vdwg.mxu0
    %v186 = vmax.f32 %v181, 0.0
    %v187 = vpack.c.bf16 %v186, %v186
    %v188 = vld [vmem:[#allocation8] sm:$0xf]
    %v189 = vld [vmem:[#allocation8 + $0x4] sm:$0xf]
    %v190 = vld [vmem:[#allocation8 + $0x8] sm:$0xf]
    %v191 = vld [vmem:[#allocation8 + $0xc] sm:$0xf]
    %v192 = vld [vmem:[#allocation8 + $0x10] sm:$0xf]
    %v193 = vld [vmem:[#allocation8 + $0x14] sm:$0xf]
    %v194 = vld [vmem:[#allocation8 + $0x18] sm:$0xf]
    %v195 = vld [vmem:[#allocation8 + $0x1c] sm:$0xf]
    %v196 = vld [vmem:[#allocation8 + $0x20] sm:$0xf]
    %v197 = vld [vmem:[#allocation8 + $0x24] sm:$0xf]
    %v198 = vld [vmem:[#allocation8 + $0x28] sm:$0xf]
    %v199 = vld [vmem:[#allocation8 + $0x2c] sm:$0xf]
    %v200 = vld [vmem:[#allocation8 + $0x30] sm:$0xf]
    %v201 = vld [vmem:[#allocation8 + $0x34] sm:$0xf]
    %v202 = vld [vmem:[#allocation8 + $0x38] sm:$0xf]
    %v203 = vld [vmem:[#allocation8 + $0x3c] sm:$0xf]
    %v204 = vld [vmem:[#allocation10] sm:$0x1]
    %v206 = vlaneseq
    %v207 = vshrl.u32 %v206, 7
    %v208 = vsub.s32 0, %v207
    %v209 = vrot.slane %v204, %v208
    %v227 = vunpack.c.l.b16 %v188
    %v228 = vunpack.c.l.b16 %v189
    %v229 = vunpack.c.l.b16 %v190
    %v230 = vunpack.c.l.b16 %v191
    %v231 = vunpack.c.l.b16 %v192
    %v232 = vunpack.c.l.b16 %v193
    %v233 = vunpack.c.l.b16 %v194
    %v234 = vunpack.c.l.b16 %v195
    %v235 = vunpack.c.l.b16 %v196
    %v236 = vunpack.c.l.b16 %v197
    %v237 = vunpack.c.l.b16 %v198
    %v238 = vunpack.c.l.b16 %v199
    %v239 = vunpack.c.l.b16 %v200
    %v240 = vunpack.c.l.b16 %v201
    %v241 = vunpack.c.l.b16 %v202
    %v242 = vunpack.c.l.b16 %v203
    %v243 = vpack.c.b16 %v228, %v227
    %v244 = vpack.c.b16 %v230, %v229
    %v245 = vpack.c.b16 %v232, %v231
    %v246 = vpack.c.b16 %v234, %v233
    %v247 = vpack.c.b16 %v236, %v235
    %v248 = vpack.c.b16 %v238, %v237
    %v249 = vpack.c.b16 %v240, %v239
    %v250 = vpack.c.b16 %v242, %v241
    %259 = vmatprep.subr.bf16.mxu0 0
    %260 = vmatpush1.bf16.msra.mxu0 %v243
    %261 = vmatprep.subr.bf16.mxu0 0
    %262 = vmatpush1.bf16.msra.mxu0 %v244
    %263 = vmatprep.subr.bf16.mxu0 0
    %264 = vmatpush1.bf16.msra.mxu0 %v245
    %265 = vmatprep.subr.bf16.mxu0 0
    %266 = vmatpush1.bf16.msra.mxu0 %v246
    %267 = vmatprep.subr.bf16.mxu0 0
    %268 = vmatpush1.bf16.msra.mxu0 %v247
    %269 = vmatprep.subr.bf16.mxu0 0
    %270 = vmatpush1.bf16.msra.mxu0 %v248
    %271 = vmatprep.subr.bf16.mxu0 0
    %272 = vmatpush1.bf16.msra.mxu0 %v249
    %273 = vmatprep.subr.bf16.mxu0 0
    %274 = vmatpush1.bf16.msra.mxu0 %v250
    %275 = vmatprep.subr.bf16.mxu0 0
    %276 = vmatpush1.bf16.msra.mxu0 0
    %277 = vmatprep.subr.bf16.mxu0 0
    %278 = vmatpush1.bf16.msra.mxu0 0
    %279 = vmatprep.subr.bf16.mxu0 0
    %280 = vmatpush1.bf16.msra.mxu0 0
    %281 = vmatprep.subr.bf16.mxu0 0
    %282 = vmatpush1.bf16.msra.mxu0 0
    %283 = vmatprep.subr.bf16.mxu0 0
    %284 = vmatpush1.bf16.msra.mxu0 0
    %285 = vmatprep.subr.bf16.mxu0 0
    %286 = vmatpush1.bf16.msra.mxu0 0
    %287 = vmatprep.subr.bf16.mxu0 0
    %288 = vmatpush1.bf16.msra.mxu0 0
    %289 = vmatprep.subr.bf16.mxu0 0
    %290 = vmatpush1.bf16.msra.mxu0 0
    %291 = vmatprep.mubr.bf16.mxu0 0
    %292 = vmatmul.mubr.bf16.gmra.mrb[0].mxu0 %v187
    %v293 = vpop.f32.mrb[0].mxu0
    %v294 = vadd.f32 %v209, %v293
    %v295 = vpop.f32.mrb[0].mxu0
    %v296 = vpop.f32.mrb[0].mxu0
    %v297 = vpop.f32.mrb[0].mxu0
    %298 = vdwg.mxu0
    %v299 = vmax.f32 %v294, 0.0
    %v300 = vpack.c.bf16 %v299, %v299
    %v301 = vld [vmem:[#allocation11] sm:$0xf]
    %v302 = vld [vmem:[#allocation11 + $0x4] sm:$0xf]
    %v303 = vld [vmem:[#allocation11 + $0x8] sm:$0xf]
    %v304 = vld [vmem:[#allocation11 + $0xc] sm:$0xf]
    %v305 = vld [vmem:[#allocation11 + $0x10] sm:$0xf]
    %v306 = vld [vmem:[#allocation11 + $0x14] sm:$0xf]
    %v307 = vld [vmem:[#allocation11 + $0x18] sm:$0xf]
    %v308 = vld [vmem:[#allocation11 + $0x1c] sm:$0xf]
    %v309 = vld [vmem:[#allocation11 + $0x20] sm:$0xf]
    %v310 = vld [vmem:[#allocation11 + $0x24] sm:$0xf]
    %v311 = vld [vmem:[#allocation11 + $0x28] sm:$0xf]
    %v312 = vld [vmem:[#allocation11 + $0x2c] sm:$0xf]
    %v313 = vld [vmem:[#allocation11 + $0x30] sm:$0xf]
    %v314 = vld [vmem:[#allocation11 + $0x34] sm:$0xf]
    %v315 = vld [vmem:[#allocation11 + $0x38] sm:$0xf]
    %v316 = vld [vmem:[#allocation11 + $0x3c] sm:$0xf]
    %v317 = vld [vmem:[#allocation13] sm:$0x1]
    %v319 = vlaneseq
    %v320 = vshrl.u32 %v319, 7
    %v321 = vsub.s32 0, %v320
    %v322 = vrot.slane %v317, %v321
    %v340 = vunpack.c.l.b16 %v301
    %v341 = vunpack.c.l.b16 %v302
    %v342 = vunpack.c.l.b16 %v303
    %v343 = vunpack.c.l.b16 %v304
    %v344 = vunpack.c.l.b16 %v305
    %v345 = vunpack.c.l.b16 %v306
    %v346 = vunpack.c.l.b16 %v307
    %v347 = vunpack.c.l.b16 %v308
    %v348 = vunpack.c.l.b16 %v309
    %v349 = vunpack.c.l.b16 %v310
    %v350 = vunpack.c.l.b16 %v311
    %v351 = vunpack.c.l.b16 %v312
    %v352 = vunpack.c.l.b16 %v313
    %v353 = vunpack.c.l.b16 %v314
    %v354 = vunpack.c.l.b16 %v315
    %v355 = vunpack.c.l.b16 %v316
    %v356 = vpack.c.b16 %v341, %v340
    %v357 = vpack.c.b16 %v343, %v342
    %v358 = vpack.c.b16 %v345, %v344
    %v359 = vpack.c.b16 %v347, %v346
    %v360 = vpack.c.b16 %v349, %v348
    %v361 = vpack.c.b16 %v351, %v350
    %v362 = vpack.c.b16 %v353, %v352
    %v363 = vpack.c.b16 %v355, %v354
    %372 = vmatprep.subr.bf16.mxu0 0
    %373 = vmatpush1.bf16.msra.mxu0 %v356
    %374 = vmatprep.subr.bf16.mxu0 0
    %375 = vmatpush1.bf16.msra.mxu0 %v357
    %376 = vmatprep.subr.bf16.mxu0 0
    %377 = vmatpush1.bf16.msra.mxu0 %v358
    %378 = vmatprep.subr.bf16.mxu0 0
    %379 = vmatpush1.bf16.msra.mxu0 %v359
    %380 = vmatprep.subr.bf16.mxu0 0
    %381 = vmatpush1.bf16.msra.mxu0 %v360
    %382 = vmatprep.subr.bf16.mxu0 0
    %383 = vmatpush1.bf16.msra.mxu0 %v361
    %384 = vmatprep.subr.bf16.mxu0 0
    %385 = vmatpush1.bf16.msra.mxu0 %v362
    %386 = vmatprep.subr.bf16.mxu0 0
    %387 = vmatpush1.bf16.msra.mxu0 %v363
    %388 = vmatprep.subr.bf16.mxu0 0
    %389 = vmatpush1.bf16.msra.mxu0 0
    %390 = vmatprep.subr.bf16.mxu0 0
    %391 = vmatpush1.bf16.msra.mxu0 0
    %392 = vmatprep.subr.bf16.mxu0 0
    %393 = vmatpush1.bf16.msra.mxu0 0
    %394 = vmatprep.subr.bf16.mxu0 0
    %395 = vmatpush1.bf16.msra.mxu0 0
    %396 = vmatprep.subr.bf16.mxu0 0
    %397 = vmatpush1.bf16.msra.mxu0 0
    %398 = vmatprep.subr.bf16.mxu0 0
    %399 = vmatpush1.bf16.msra.mxu0 0
    %400 = vmatprep.subr.bf16.mxu0 0
    %401 = vmatpush1.bf16.msra.mxu0 0
    %402 = vmatprep.subr.bf16.mxu0 0
    %403 = vmatpush1.bf16.msra.mxu0 0
    %404 = vmatprep.mubr.bf16.mxu0 0
    %405 = vmatmul.mubr.bf16.gmra.mrb[0].mxu0 %v300
    %v406 = vpop.f32.mrb[0].mxu0
    %v407 = vadd.f32 %v322, %v406
    %v408 = vpop.f32.mrb[0].mxu0
    %v409 = vpop.f32.mrb[0].mxu0
    %v410 = vpop.f32.mrb[0].mxu0
    %411 = vdwg.mxu0
    %v412 = vmax.f32 %v407, -20.0
    %v413 = vmin.f32 %v412, 3.0
    %v414 = vmul.f32 %v413, 1.442695
    %v415 = vpow.pop %v414
    %v416 = vlaneseq
    %v417 = vand.u32 %v416, 127
    %vm418 = vcmp.lt.s32.totalorder %v417, 6
    %v419 = vsel %vm418, %v407, %v415
    %420 = vst [vmem:[#allocation14] sm:$0xff] %v419
    // Predicated region
    $region58: #{tpu_custom_call.1} parent=1 // pred_check
      _
    $region59: #{tpu_custom_call.1} parent=1 // pred_check_branch
      %422 = sbr.rel (0) target = $region61
    $region60: #{tpu_custom_call.1} parent=1 // pred_region
      %s424 = ssub.s32 128, 128
      %425 = vsyncadd [#allocation4], %s424
      %s427 = sshll.u32 [#allocation14], 4
      %s428 = int_to_ptr.vmem [resolvable:$true] %s427
      %430 = dma.vmem_to_hbm [thread:$0]  %s428, 128, %s7, [#allocation4]
    $region61: #{tpu_custom_call.1} parent=1 // pred_fallthru
      _
    // Predicated region
    $region62: #{tpu_custom_call.1} parent=1 // pred_check
      _
    $region63: #{tpu_custom_call.1} parent=1 // pred_check_branch
      %432 = sbr.rel (0) target = $region65
    $region64: #{tpu_custom_call.1} parent=1 // pred_region
      %433 = dma.done [#allocation4], 128
    $region65: #{tpu_custom_call.1} parent=1 // pred_fallthru
      _
    %434 = vsyncpa [#allocation3], 1
    %435 = vsyncpa [#allocation6], 1
    %436 = vsyncpa [#allocation9], 1
    %437 = vsyncpa [#allocation12], 1
    %438 = vsyncpa [#allocation4], 1

</llo_original>
